<compile_context>
chip_gen: v5e
topology: v5e:2x2
jax: 0.10.0
libtpu: 0.0.40
codegen_flags: <defaults>
</compile_context>

<pallas_src>
import functools

import jax
import jax.numpy as jnp
from jax.experimental import pallas as pl
from jax.experimental.pallas import tpu as pltpu


# ----------------------------------------------------------------------------
# Shared math helpers (pure jnp, usable both inside the kernel and in the ref).
# ----------------------------------------------------------------------------
def _cv_squared(v):
    """v: (..., E) -> (..., 1).  Matches torch.var (unbiased) / (mean**2 + 1e-10)."""
    n = v.shape[-1]
    mean = jnp.sum(v, axis=-1, keepdims=True) / n
    var = jnp.sum((v - mean) ** 2, axis=-1, keepdims=True) / (n - 1)
    return var / (mean * mean + 1e-10)


def _topk_softmax_gates(logits, k):
    """logits: (R, E) -> gates (R, E): softmax over the k largest entries per row
    (ties broken toward the lower index, matching a stable descending sort); all
    non-top-k entries are exactly zero."""
    R, E = logits.shape
    col_idx = jax.lax.broadcasted_iota(jnp.int32, (R, E), 1)
    rank = jnp.zeros((R, E), jnp.int32)
    # E is tiny (2*n_tasks); a short static loop of (R, E) compares is cheap.
    for e in range(E):
        col = logits[:, e:e + 1]                               # (R, 1)
        ahead = (col > logits) | ((col == logits) & (e < col_idx))
        rank = rank + ahead.astype(jnp.int32)
    mask = rank < k
    m = jnp.max(jnp.where(mask, logits, -1e30), axis=-1, keepdims=True)
    p = jnp.where(mask, jnp.exp(logits - m), 0.0)
    return p / jnp.sum(p, axis=-1, keepdims=True)


# ----------------------------------------------------------------------------
# Pallas kernel: one invocation handles all candidates / tasks / experts.
# ----------------------------------------------------------------------------
def moe_regression_kernel(
    x_ref,                      # (R, D)       R = C*B, candidate-major rows
    fc1_w_ref, fc1_b_ref,       # (D, H), (1, H)
    fc2_w_ref, fc2_b_ref,       # (H, H), (1, H)
    wbig_ref, bbig_ref,         # (H, E*EH + T*E), (1, E*EH + T*E)   expert-fc1 + gates fused
    wpt_ref, pb_ref,            # (E*EH, T*E), (1, T*E)   block-diag(ew2 @ tower_w), eb2 @ tower_w
    tower_b_ref,                # (1, T)
    seg2task_ref,               # (T*E, T)     constant segment-sum matrix
    sel_ref,                    # (C, R)       constant candidate-row selector
    scores_ref,                 # out: (R, T)
    aux_ref,                    # out: (1, 1)
    *, n_tasks, num_experts, expert_hidden, k, loss_coef,
):
    T, E, EH = n_tasks, num_experts, expert_hidden
    N = T * E
    EEH = E * EH
    f32 = jnp.float32
    dot = lambda a, b: jnp.dot(a, b, preferred_element_type=f32)

    # Shared trunk over all candidate rows at once: fc2(relu(fc1(x)))
    h = dot(x_ref[...], fc1_w_ref[...]) + fc1_b_ref[...]
    h = jnp.maximum(h, 0.0)
    h = dot(h, fc2_w_ref[...]) + fc2_b_ref[...]

    # ONE matmul produces the expert hidden layer AND every task's gate logits.
    big = dot(h, wbig_ref[...]) + bbig_ref[...]             # (R, EEH + N)
    he = jnp.maximum(big[:, :EEH], 0.0)                     # (R, EEH)
    logits_all = big[:, EEH:]                               # (R, N), col = t*E + e

    # All expert-through-tower projections in one block-diagonal matmul:
    #   P[:, t*E + e] = (relu_e @ ew2[e] + eb2[e]) @ tower_w[:, t]
    P = dot(he, wpt_ref[...]) + pb_ref[...]                 # (R, N)

    # Top-k softmax gating per task.  T and E are tiny (2 and 4); static lane slices and
    # a single lane concat keep this VPU-only (no extra MXU round trips — item 5 traded
    # off deliberately: fusing the rank loop would need segment-broadcast matmuls).
    gates_all = jnp.concatenate(
        [_topk_softmax_gates(logits_all[:, t * E:(t + 1) * E], k) for t in range(T)],
        axis=1)                                             # (R, N)

    # Scores: one elementwise combine, one segment-sum matmul, one full-tile store.
    #   score[:, t] = sigmoid( sum_e gates[:, t*E+e] * P[:, t*E+e] + tower_b[t] )
    weighted = gates_all * P                                # (R, N)
    scores_pre = dot(weighted, seg2task_ref[...]) + tower_b_ref[...]   # (R, T)
    scores_ref[...] = jax.nn.sigmoid(scores_pre)

    # Aux loss: per-candidate importance/load reductions for ALL tasks in one selector matmul.
    stats = jnp.concatenate([gates_all, (gates_all > 0.0).astype(f32)], axis=1)  # (R, 2N)
    imp_load = dot(sel_ref[...], stats)                     # (C, 2N)
    aux = jnp.zeros((1, 1), f32)
    for t in range(T):
        imp = imp_load[:, t * E:(t + 1) * E]                # (C, E)
        load = imp_load[:, N + t * E:N + (t + 1) * E]       # (C, E)
        cv = _cv_squared(imp) + _cv_squared(load)           # (C, 1)
        aux = aux + loss_coef * jnp.sum(cv, axis=0, keepdims=True)
    aux_ref[...] = aux


# ----------------------------------------------------------------------------
# Wrapper
# ----------------------------------------------------------------------------
def moe_regression_forward(x, params, *, n_tasks, num_experts, k, loss_coef=1e-2):
    B, C, D = x.shape
    H = params["fc1_w"].shape[1]
    EH = params["ew1"].shape[2]
    T, E = n_tasks, num_experts
    N = T * E
    R = C * B
    hi = jax.lax.Precision.HIGHEST   # wrapper precomputations at full precision

    # --- Layout plumbing (XLA side): candidate-major rows + fused weight slabs. ---
    x_flat = jnp.transpose(x, (1, 0, 2)).reshape(R, D)                        # (R, D)
    wgate_cat = jnp.transpose(params["w_gate"], (1, 0, 2)).reshape(H, N)      # (H, N)
    ew1_cat = jnp.transpose(params["ew1"], (1, 0, 2)).reshape(H, E * EH)      # (H, E*EH)
    eb1_cat = params["eb1"].reshape(1, E * EH)
    wbig = jnp.concatenate([ew1_cat, wgate_cat], axis=1)                      # (H, E*EH+N)
    bbig = jnp.concatenate([eb1_cat, jnp.zeros((1, N), jnp.float32)], axis=1)

    # Block-diagonal expert-fc2-through-tower weights:
    #   wpt[e*EH + i, t*E + e] = (ew2[e] @ tower_w)[i, t];  pb[t*E + e] = (eb2[e] @ tower_w)[0, t]
    pt = jnp.einsum('eih,ht->eit', params["ew2"], params["tower_w"], precision=hi)   # (E,EH,T)
    eye_e = jnp.eye(E, dtype=jnp.float32)
    wpt = (pt[:, :, :, None] * eye_e[:, None, None, :]).reshape(E * EH, N)           # (E*EH, N)
    pbt = jnp.einsum('eih,ht->eit', params["eb2"], params["tower_w"], precision=hi)[:, 0, :]  # (E,T)
    pb = pbt.T.reshape(1, N)

    seg2task = jnp.repeat(jnp.eye(T, dtype=jnp.float32), E, axis=0)           # (N, T)
    sel = jnp.repeat(jnp.eye(C, dtype=jnp.float32), B, axis=1)                # (C, R)

    kernel = functools.partial(
        moe_regression_kernel, n_tasks=T, num_experts=E, expert_hidden=EH,
        k=k, loss_coef=loss_coef)

    # Single un-gridded invocation: every operand is a whole-array VMEM block.
    # TODO(synk): at production sizes (H, EH ~ 1024) cast x/weight slabs to bf16 for the
    # matmuls (keep f32 accumulation), add a leading "parallel" row-tile grid axis so the
    # second v7x TensorCore is used (R=12 here is too small for an (8,128)-legal split),
    # and re-derive vmem_limit_bytes against v7x's 64 MiB physical VMEM.
    scores_flat, aux = pl.pallas_call(
        kernel,
        out_shape=(
            jax.ShapeDtypeStruct((R, T), jnp.float32),      # pred scores (candidate-major)
            jax.ShapeDtypeStruct((1, 1), jnp.float32),      # total aux loss
        ),
        compiler_params=pltpu.CompilerParams(vmem_limit_bytes=32 * 1024 * 1024),
    )(
        x_flat,
        params["fc1_w"], params["fc1_b"],
        params["fc2_w"], params["fc2_b"],
        wbig, bbig,
        wpt, pb,
        params["tower_b"],
        seg2task, sel,
    )

    pred_scores = scores_flat.reshape(C, B, T).transpose(1, 0, 2)  # (B, C, T) torch order
    return pred_scores, aux[0, 0]


# ----------------------------------------------------------------------------
# Pure-JAX reference (same eval-mode semantics), for a correctness check.
# Uses Precision.HIGHEST; the kernel uses the MXU default f32 path, hence 5e-3 tol.
# ----------------------------------------------------------------------------
def moe_regression_ref(x, params, *, n_tasks, num_experts, k, loss_coef=1e-2):
    P = jax.lax.Precision.HIGHEST
    dot = lambda a, b: jnp.dot(a, b, precision=P, preferred_element_type=jnp.float32)
    B, C, D = x.shape
    scores = []
    aux = jnp.zeros((), jnp.float32)
    for i in range(C):
        encs = x[:, i, :]
        h = jnp.maximum(dot(encs, params["fc1_w"]) + params["fc1_b"], 0.0)
        h = dot(h, params["fc2_w"]) + params["fc2_b"]
        e_outs = []
        for e in range(num_experts):
            he = jnp.maximum(dot(h, params["ew1"][e]) + params["eb1"][e], 0.0)
            e_outs.append(dot(he, params["ew2"][e]) + params["eb2"][e])
        cols = []
        for t in range(n_tasks):
            logits = dot(h, params["w_gate"][t])
            gates = _topk_softmax_gates(logits, k)
            imp = jnp.sum(gates, axis=0, keepdims=True)
            load = jnp.sum((gates > 0.0).astype(jnp.float32), axis=0, keepdims=True)
            aux = aux + loss_coef * (_cv_squared(imp) + _cv_squared(load))[0, 0]
            y = sum(gates[:, e:e + 1] * e_outs[e] for e in range(num_experts))
            s = dot(y, params["tower_w"][:, t:t + 1]) + params["tower_b"][:, t:t + 1]
            cols.append(jax.nn.sigmoid(s[:, 0]))
        scores.append(jnp.stack(cols, axis=1))
    return jnp.stack(scores, axis=1), aux


# ----------------------------------------------------------------------------
# Deterministic parameter init (synthetic; shapes follow MoERegression.__init__).
# Note: the torch module initializes w_gate to zeros; here we use random values so
# top-k gating is actually exercised.  w_noise is unused in eval mode.
# ----------------------------------------------------------------------------
def init_params(key, n_tasks, input_size, hidden_size, num_experts, expert_hidden_size):
    ks = jax.random.split(key, 11)
    s = 0.1
    f32 = jnp.float32
    return dict(
        fc1_w=jax.random.normal(ks[0], (input_size, hidden_size), f32) * s,
        fc1_b=jax.random.normal(ks[1], (1, hidden_size), f32) * s,
        fc2_w=jax.random.normal(ks[2], (hidden_size, hidden_size), f32) * s,
        fc2_b=jax.random.normal(ks[3], (1, hidden_size), f32) * s,
        w_gate=jax.random.normal(ks[4], (n_tasks, hidden_size, num_experts), f32),
        ew1=jax.random.normal(ks[5], (num_experts, hidden_size, expert_hidden_size), f32) * s,
        eb1=jax.random.normal(ks[6], (num_experts, 1, expert_hidden_size), f32) * s,
        ew2=jax.random.normal(ks[7], (num_experts, expert_hidden_size, hidden_size), f32) * s,
        eb2=jax.random.normal(ks[8], (num_experts, 1, hidden_size), f32) * s,
        tower_w=jax.random.normal(ks[9], (hidden_size, n_tasks), f32) * s,
        tower_b=jax.random.normal(ks[10], (1, n_tasks), f32) * s,
    )


if __name__ == "__main__":
    # Small shapes consistent with the module's forward.
    n_tasks = 2
    input_size = 32
    hidden_size = 32
    expert_hidden_size = 64
    num_experts = 2 * n_tasks          # default in __init__
    k = num_experts // 2               # default in __init__
    batch, n_candidates = 4, 3

    root = jax.random.PRNGKey(0)
    k_x, k_p = jax.random.split(root)
    x = jax.random.normal(k_x, (batch, n_candidates, input_size), jnp.float32)
    params = init_params(k_p, n_tasks, input_size, hidden_size, num_experts,
                         expert_hidden_size)

    pred_scores, total_aux_loss = moe_regression_forward(
        x, params, n_tasks=n_tasks, num_experts=num_experts, k=k)
    pred_scores = jax.block_until_ready(pred_scores)
    total_aux_loss = jax.block_until_ready(total_aux_loss)

    ref_scores, ref_aux = moe_regression_ref(
        x, params, n_tasks=n_tasks, num_experts=num_experts, k=k)

    assert pred_scores.shape == (batch, n_candidates, n_tasks)
    assert jnp.allclose(pred_scores, ref_scores, atol=5e-3, rtol=5e-3), (
        pred_scores, ref_scores)
    assert jnp.allclose(total_aux_loss, ref_aux, atol=5e-3, rtol=5e-3), (
        total_aux_loss, ref_aux)

    print("KERNEL_OK")
</pallas_src>

<mosaic_0001>
module attributes {stable_mosaic.version = 11 : i64} {
  func.func @moe_regression_kernel(%arg0: memref<12x32xf32, #tpu.memory_space<vmem>>, %arg1: memref<32x32xf32, #tpu.memory_space<vmem>>, %arg2: memref<1x32xf32, #tpu.memory_space<vmem>>, %arg3: memref<32x32xf32, #tpu.memory_space<vmem>>, %arg4: memref<1x32xf32, #tpu.memory_space<vmem>>, %arg5: memref<32x264xf32, #tpu.memory_space<vmem>>, %arg6: memref<1x264xf32, #tpu.memory_space<vmem>>, %arg7: memref<256x8xf32, #tpu.memory_space<vmem>>, %arg8: memref<1x8xf32, #tpu.memory_space<vmem>>, %arg9: memref<1x2xf32, #tpu.memory_space<vmem>>, %arg10: memref<8x2xf32, #tpu.memory_space<vmem>>, %arg11: memref<3x12xf32, #tpu.memory_space<vmem>>, %arg12: memref<12x2xf32, #tpu.memory_space<vmem>>, %arg13: memref<1x1xf32, #tpu.memory_space<vmem>>) attributes {dimension_semantics = [], scalar_prefetch = 0 : i64, scratch_operands = 0 : i64, tpu.core_type = #tpu.core_type<tc>} {
    %c0 = arith.constant 0 : index
    %c0_0 = arith.constant 0 : index
    %0 = vector.load %arg0[%c0, %c0_0] : memref<12x32xf32, #tpu.memory_space<vmem>>, vector<12x32xf32>
    %c0_1 = arith.constant 0 : index
    %c0_2 = arith.constant 0 : index
    %1 = vector.load %arg1[%c0_1, %c0_2] : memref<32x32xf32, #tpu.memory_space<vmem>>, vector<32x32xf32>
    %cst = arith.constant dense<0.000000e+00> : vector<12x32xf32>
    %2 = tpu.matmul %0, %1, %cst {dimension_numbers = #tpu.dot_dimension_numbers<[1], [0], [0], [1], [0, 0, 1, 1], [], []>} : vector<12x32xf32>, vector<32x32xf32>, vector<12x32xf32> -> vector<12x32xf32>
    %c0_3 = arith.constant 0 : index
    %c0_4 = arith.constant 0 : index
    %3 = vector.load %arg2[%c0_3, %c0_4] : memref<1x32xf32, #tpu.memory_space<vmem>>, vector<1x32xf32>
    %4 = vector.broadcast %3 : vector<1x32xf32> to vector<12x32xf32>
    %5 = arith.addf %2, %4 : vector<12x32xf32>
    %cst_5 = arith.constant 0.000000e+00 : f32
    %6 = vector.broadcast %cst_5 : f32 to vector<12x32xf32>
    %7 = arith.maximumf %5, %6 : vector<12x32xf32>
    %c0_6 = arith.constant 0 : index
    %c0_7 = arith.constant 0 : index
    %8 = vector.load %arg3[%c0_6, %c0_7] : memref<32x32xf32, #tpu.memory_space<vmem>>, vector<32x32xf32>
    %cst_8 = arith.constant dense<0.000000e+00> : vector<12x32xf32>
    %9 = tpu.matmul %7, %8, %cst_8 {dimension_numbers = #tpu.dot_dimension_numbers<[1], [0], [0], [1], [0, 0, 1, 1], [], []>} : vector<12x32xf32>, vector<32x32xf32>, vector<12x32xf32> -> vector<12x32xf32>
    %c0_9 = arith.constant 0 : index
    %c0_10 = arith.constant 0 : index
    %10 = vector.load %arg4[%c0_9, %c0_10] : memref<1x32xf32, #tpu.memory_space<vmem>>, vector<1x32xf32>
    %11 = vector.broadcast %10 : vector<1x32xf32> to vector<12x32xf32>
    %12 = arith.addf %9, %11 : vector<12x32xf32>
    %c0_11 = arith.constant 0 : index
    %c0_12 = arith.constant 0 : index
    %13 = vector.load %arg5[%c0_11, %c0_12] : memref<32x264xf32, #tpu.memory_space<vmem>>, vector<32x264xf32>
    %cst_13 = arith.constant dense<0.000000e+00> : vector<12x264xf32>
    %14 = tpu.matmul %12, %13, %cst_13 {dimension_numbers = #tpu.dot_dimension_numbers<[1], [0], [0], [1], [0, 0, 1, 1], [], []>} : vector<12x32xf32>, vector<32x264xf32>, vector<12x264xf32> -> vector<12x264xf32>
    %c0_14 = arith.constant 0 : index
    %c0_15 = arith.constant 0 : index
    %15 = vector.load %arg6[%c0_14, %c0_15] : memref<1x264xf32, #tpu.memory_space<vmem>>, vector<1x264xf32>
    %16 = vector.broadcast %15 : vector<1x264xf32> to vector<12x264xf32>
    %17 = arith.addf %14, %16 : vector<12x264xf32>
    %18 = vector.extract_strided_slice %17 {offsets = [0, 0], sizes = [12, 256], strides = [1, 1]} : vector<12x264xf32> to vector<12x256xf32>
    %cst_16 = arith.constant 0.000000e+00 : f32
    %19 = vector.broadcast %cst_16 : f32 to vector<12x256xf32>
    %20 = arith.maximumf %18, %19 : vector<12x256xf32>
    %21 = vector.extract_strided_slice %17 {offsets = [0, 256], sizes = [12, 8], strides = [1, 1]} : vector<12x264xf32> to vector<12x8xf32>
    %c0_17 = arith.constant 0 : index
    %c0_18 = arith.constant 0 : index
    %22 = vector.load %arg7[%c0_17, %c0_18] : memref<256x8xf32, #tpu.memory_space<vmem>>, vector<256x8xf32>
    %cst_19 = arith.constant dense<0.000000e+00> : vector<12x8xf32>
    %23 = tpu.matmul %20, %22, %cst_19 {dimension_numbers = #tpu.dot_dimension_numbers<[1], [0], [0], [1], [0, 0, 1, 1], [], []>} : vector<12x256xf32>, vector<256x8xf32>, vector<12x8xf32> -> vector<12x8xf32>
    %c0_20 = arith.constant 0 : index
    %c0_21 = arith.constant 0 : index
    %24 = vector.load %arg8[%c0_20, %c0_21] : memref<1x8xf32, #tpu.memory_space<vmem>>, vector<1x8xf32>
    %25 = vector.broadcast %24 : vector<1x8xf32> to vector<12x8xf32>
    %26 = arith.addf %23, %25 : vector<12x8xf32>
    %27 = vector.extract_strided_slice %21 {offsets = [0, 0], sizes = [12, 4], strides = [1, 1]} : vector<12x8xf32> to vector<12x4xf32>
    %28 = tpu.iota {dimensions = array<i32: 1>} : vector<12x4xi32>
    %c0_i32 = arith.constant 0 : i32
    %29 = vector.broadcast %c0_i32 : i32 to vector<12x4xi32>
    %30 = vector.extract_strided_slice %27 {offsets = [0, 0], sizes = [12, 1], strides = [1, 1]} : vector<12x4xf32> to vector<12x1xf32>
    %31 = vector.broadcast %30 : vector<12x1xf32> to vector<12x4xf32>
    %32 = arith.cmpf ogt, %31, %27 : vector<12x4xf32>
    %33 = vector.broadcast %30 : vector<12x1xf32> to vector<12x4xf32>
    %34 = arith.cmpf oeq, %33, %27 : vector<12x4xf32>
    %c0_i32_22 = arith.constant 0 : i32
    %35 = vector.broadcast %c0_i32_22 : i32 to vector<12x4xi32>
    %36 = arith.cmpi sgt, %28, %35 : vector<12x4xi32>
    %37 = arith.andi %34, %36 : vector<12x4xi1>
    %38 = arith.ori %32, %37 : vector<12x4xi1>
    %39 = arith.extui %38 : vector<12x4xi1> to vector<12x4xi32>
    %40 = arith.addi %29, %39 : vector<12x4xi32>
    %41 = vector.extract_strided_slice %27 {offsets = [0, 1], sizes = [12, 1], strides = [1, 1]} : vector<12x4xf32> to vector<12x1xf32>
    %42 = vector.broadcast %41 : vector<12x1xf32> to vector<12x4xf32>
    %43 = arith.cmpf ogt, %42, %27 : vector<12x4xf32>
    %44 = vector.broadcast %41 : vector<12x1xf32> to vector<12x4xf32>
    %45 = arith.cmpf oeq, %44, %27 : vector<12x4xf32>
    %c1_i32 = arith.constant 1 : i32
    %46 = vector.broadcast %c1_i32 : i32 to vector<12x4xi32>
    %47 = arith.cmpi sgt, %28, %46 : vector<12x4xi32>
    %48 = arith.andi %45, %47 : vector<12x4xi1>
    %49 = arith.ori %43, %48 : vector<12x4xi1>
    %50 = arith.extui %49 : vector<12x4xi1> to vector<12x4xi32>
    %51 = arith.addi %40, %50 : vector<12x4xi32>
    %52 = vector.extract_strided_slice %27 {offsets = [0, 2], sizes = [12, 1], strides = [1, 1]} : vector<12x4xf32> to vector<12x1xf32>
    %53 = vector.broadcast %52 : vector<12x1xf32> to vector<12x4xf32>
    %54 = arith.cmpf ogt, %53, %27 : vector<12x4xf32>
    %55 = vector.broadcast %52 : vector<12x1xf32> to vector<12x4xf32>
    %56 = arith.cmpf oeq, %55, %27 : vector<12x4xf32>
    %c2_i32 = arith.constant 2 : i32
    %57 = vector.broadcast %c2_i32 : i32 to vector<12x4xi32>
    %58 = arith.cmpi sgt, %28, %57 : vector<12x4xi32>
    %59 = arith.andi %56, %58 : vector<12x4xi1>
    %60 = arith.ori %54, %59 : vector<12x4xi1>
    %61 = arith.extui %60 : vector<12x4xi1> to vector<12x4xi32>
    %62 = arith.addi %51, %61 : vector<12x4xi32>
    %63 = vector.extract_strided_slice %27 {offsets = [0, 3], sizes = [12, 1], strides = [1, 1]} : vector<12x4xf32> to vector<12x1xf32>
    %64 = vector.broadcast %63 : vector<12x1xf32> to vector<12x4xf32>
    %65 = arith.cmpf ogt, %64, %27 : vector<12x4xf32>
    %66 = vector.broadcast %63 : vector<12x1xf32> to vector<12x4xf32>
    %67 = arith.cmpf oeq, %66, %27 : vector<12x4xf32>
    %c3_i32 = arith.constant 3 : i32
    %68 = vector.broadcast %c3_i32 : i32 to vector<12x4xi32>
    %69 = arith.cmpi sgt, %28, %68 : vector<12x4xi32>
    %70 = arith.andi %67, %69 : vector<12x4xi1>
    %71 = arith.ori %65, %70 : vector<12x4xi1>
    %72 = arith.extui %71 : vector<12x4xi1> to vector<12x4xi32>
    %73 = arith.addi %62, %72 : vector<12x4xi32>
    %c2_i32_23 = arith.constant 2 : i32
    %74 = vector.broadcast %c2_i32_23 : i32 to vector<12x4xi32>
    %75 = arith.cmpi slt, %73, %74 : vector<12x4xi32>
    %cst_24 = arith.constant -1.000000e+30 : f32
    %76 = vector.broadcast %cst_24 : f32 to vector<12x4xf32>
    %77 = arith.select %75, %27, %76 : vector<12x4xi1>, vector<12x4xf32>
    %cst_25 = arith.constant dense<0xFF800000> : vector<12xf32>
    %78 = vector.multi_reduction <maximumf>, %77, %cst_25 [1] : vector<12x4xf32> to vector<12xf32>
    %79 = vector.shape_cast %78 : vector<12xf32> to vector<12x1xf32>
    %80 = vector.broadcast %79 : vector<12x1xf32> to vector<12x4xf32>
    %81 = arith.subf %27, %80 : vector<12x4xf32>
    %82 = math.exp %81 : vector<12x4xf32>
    %cst_26 = arith.constant 0.000000e+00 : f32
    %83 = vector.broadcast %cst_26 : f32 to vector<12x4xf32>
    %84 = arith.select %75, %82, %83 : vector<12x4xi1>, vector<12x4xf32>
    %cst_27 = arith.constant dense<0.000000e+00> : vector<12xf32>
    %85 = vector.multi_reduction <add>, %84, %cst_27 [1] : vector<12x4xf32> to vector<12xf32>
    %86 = vector.shape_cast %85 : vector<12xf32> to vector<12x1xf32>
    %87 = vector.broadcast %86 : vector<12x1xf32> to vector<12x4xf32>
    %88 = arith.divf %84, %87 : vector<12x4xf32>
    %89 = vector.extract_strided_slice %21 {offsets = [0, 4], sizes = [12, 4], strides = [1, 1]} : vector<12x8xf32> to vector<12x4xf32>
    %90 = tpu.iota {dimensions = array<i32: 1>} : vector<12x4xi32>
    %c0_i32_28 = arith.constant 0 : i32
    %91 = vector.broadcast %c0_i32_28 : i32 to vector<12x4xi32>
    %92 = vector.extract_strided_slice %89 {offsets = [0, 0], sizes = [12, 1], strides = [1, 1]} : vector<12x4xf32> to vector<12x1xf32>
    %93 = vector.broadcast %92 : vector<12x1xf32> to vector<12x4xf32>
    %94 = arith.cmpf ogt, %93, %89 : vector<12x4xf32>
    %95 = vector.broadcast %92 : vector<12x1xf32> to vector<12x4xf32>
    %96 = arith.cmpf oeq, %95, %89 : vector<12x4xf32>
    %c0_i32_29 = arith.constant 0 : i32
    %97 = vector.broadcast %c0_i32_29 : i32 to vector<12x4xi32>
    %98 = arith.cmpi sgt, %90, %97 : vector<12x4xi32>
    %99 = arith.andi %96, %98 : vector<12x4xi1>
    %100 = arith.ori %94, %99 : vector<12x4xi1>
    %101 = arith.extui %100 : vector<12x4xi1> to vector<12x4xi32>
    %102 = arith.addi %91, %101 : vector<12x4xi32>
    %103 = vector.extract_strided_slice %89 {offsets = [0, 1], sizes = [12, 1], strides = [1, 1]} : vector<12x4xf32> to vector<12x1xf32>
    %104 = vector.broadcast %103 : vector<12x1xf32> to vector<12x4xf32>
    %105 = arith.cmpf ogt, %104, %89 : vector<12x4xf32>
    %106 = vector.broadcast %103 : vector<12x1xf32> to vector<12x4xf32>
    %107 = arith.cmpf oeq, %106, %89 : vector<12x4xf32>
    %c1_i32_30 = arith.constant 1 : i32
    %108 = vector.broadcast %c1_i32_30 : i32 to vector<12x4xi32>
    %109 = arith.cmpi sgt, %90, %108 : vector<12x4xi32>
    %110 = arith.andi %107, %109 : vector<12x4xi1>
    %111 = arith.ori %105, %110 : vector<12x4xi1>
    %112 = arith.extui %111 : vector<12x4xi1> to vector<12x4xi32>
    %113 = arith.addi %102, %112 : vector<12x4xi32>
    %114 = vector.extract_strided_slice %89 {offsets = [0, 2], sizes = [12, 1], strides = [1, 1]} : vector<12x4xf32> to vector<12x1xf32>
    %115 = vector.broadcast %114 : vector<12x1xf32> to vector<12x4xf32>
    %116 = arith.cmpf ogt, %115, %89 : vector<12x4xf32>
    %117 = vector.broadcast %114 : vector<12x1xf32> to vector<12x4xf32>
    %118 = arith.cmpf oeq, %117, %89 : vector<12x4xf32>
    %c2_i32_31 = arith.constant 2 : i32
    %119 = vector.broadcast %c2_i32_31 : i32 to vector<12x4xi32>
    %120 = arith.cmpi sgt, %90, %119 : vector<12x4xi32>
    %121 = arith.andi %118, %120 : vector<12x4xi1>
    %122 = arith.ori %116, %121 : vector<12x4xi1>
    %123 = arith.extui %122 : vector<12x4xi1> to vector<12x4xi32>
    %124 = arith.addi %113, %123 : vector<12x4xi32>
    %125 = vector.extract_strided_slice %89 {offsets = [0, 3], sizes = [12, 1], strides = [1, 1]} : vector<12x4xf32> to vector<12x1xf32>
    %126 = vector.broadcast %125 : vector<12x1xf32> to vector<12x4xf32>
    %127 = arith.cmpf ogt, %126, %89 : vector<12x4xf32>
    %128 = vector.broadcast %125 : vector<12x1xf32> to vector<12x4xf32>
    %129 = arith.cmpf oeq, %128, %89 : vector<12x4xf32>
    %c3_i32_32 = arith.constant 3 : i32
    %130 = vector.broadcast %c3_i32_32 : i32 to vector<12x4xi32>
    %131 = arith.cmpi sgt, %90, %130 : vector<12x4xi32>
    %132 = arith.andi %129, %131 : vector<12x4xi1>
    %133 = arith.ori %127, %132 : vector<12x4xi1>
    %134 = arith.extui %133 : vector<12x4xi1> to vector<12x4xi32>
    %135 = arith.addi %124, %134 : vector<12x4xi32>
    %c2_i32_33 = arith.constant 2 : i32
    %136 = vector.broadcast %c2_i32_33 : i32 to vector<12x4xi32>
    %137 = arith.cmpi slt, %135, %136 : vector<12x4xi32>
    %cst_34 = arith.constant -1.000000e+30 : f32
    %138 = vector.broadcast %cst_34 : f32 to vector<12x4xf32>
    %139 = arith.select %137, %89, %138 : vector<12x4xi1>, vector<12x4xf32>
    %cst_35 = arith.constant dense<0xFF800000> : vector<12xf32>
    %140 = vector.multi_reduction <maximumf>, %139, %cst_35 [1] : vector<12x4xf32> to vector<12xf32>
    %141 = vector.shape_cast %140 : vector<12xf32> to vector<12x1xf32>
    %142 = vector.broadcast %141 : vector<12x1xf32> to vector<12x4xf32>
    %143 = arith.subf %89, %142 : vector<12x4xf32>
    %144 = math.exp %143 : vector<12x4xf32>
    %cst_36 = arith.constant 0.000000e+00 : f32
    %145 = vector.broadcast %cst_36 : f32 to vector<12x4xf32>
    %146 = arith.select %137, %144, %145 : vector<12x4xi1>, vector<12x4xf32>
    %cst_37 = arith.constant dense<0.000000e+00> : vector<12xf32>
    %147 = vector.multi_reduction <add>, %146, %cst_37 [1] : vector<12x4xf32> to vector<12xf32>
    %148 = vector.shape_cast %147 : vector<12xf32> to vector<12x1xf32>
    %149 = vector.broadcast %148 : vector<12x1xf32> to vector<12x4xf32>
    %150 = arith.divf %146, %149 : vector<12x4xf32>
    %151 = tpu.concatenate %88, %150 in 1 : vector<12x4xf32>, vector<12x4xf32> -> vector<12x8xf32>
    %152 = arith.mulf %151, %26 : vector<12x8xf32>
    %c0_38 = arith.constant 0 : index
    %c0_39 = arith.constant 0 : index
    %153 = vector.load %arg10[%c0_38, %c0_39] : memref<8x2xf32, #tpu.memory_space<vmem>>, vector<8x2xf32>
    %cst_40 = arith.constant dense<0.000000e+00> : vector<12x2xf32>
    %154 = tpu.matmul %152, %153, %cst_40 {dimension_numbers = #tpu.dot_dimension_numbers<[1], [0], [0], [1], [0, 0, 1, 1], [], []>} : vector<12x8xf32>, vector<8x2xf32>, vector<12x2xf32> -> vector<12x2xf32>
    %c0_41 = arith.constant 0 : index
    %c0_42 = arith.constant 0 : index
    %155 = vector.load %arg9[%c0_41, %c0_42] : memref<1x2xf32, #tpu.memory_space<vmem>>, vector<1x2xf32>
    %156 = vector.broadcast %155 : vector<1x2xf32> to vector<12x2xf32>
    %157 = arith.addf %154, %156 : vector<12x2xf32>
    %158 = arith.negf %157 : vector<12x2xf32>
    %159 = math.exp %158 : vector<12x2xf32>
    %cst_43 = arith.constant 1.000000e+00 : f32
    %160 = vector.broadcast %cst_43 : f32 to vector<12x2xf32>
    %161 = arith.addf %160, %159 : vector<12x2xf32>
    %162 = arith.divf %160, %161 : vector<12x2xf32>
    %c0_44 = arith.constant 0 : index
    %c0_45 = arith.constant 0 : index
    %163 = vector.load %arg12[%c0_44, %c0_45] : memref<12x2xf32, #tpu.memory_space<vmem>>, vector<12x2xf32>
    tpu.vector_store %arg12[%c0_44, %c0_45], %162 {strides = array<i32>} : memref<12x2xf32, #tpu.memory_space<vmem>>, vector<12x2xf32>,
    %cst_46 = arith.constant 0.000000e+00 : f32
    %164 = vector.broadcast %cst_46 : f32 to vector<12x8xf32>
    %165 = arith.cmpf ogt, %151, %164 : vector<12x8xf32>
    %166 = arith.extui %165 : vector<12x8xi1> to vector<12x8xi32>
    %167 = arith.sitofp %166 : vector<12x8xi32> to vector<12x8xf32>
    %168 = tpu.concatenate %151, %167 in 1 : vector<12x8xf32>, vector<12x8xf32> -> vector<12x16xf32>
    %c0_47 = arith.constant 0 : index
    %c0_48 = arith.constant 0 : index
    %169 = vector.load %arg11[%c0_47, %c0_48] : memref<3x12xf32, #tpu.memory_space<vmem>>, vector<3x12xf32>
    %cst_49 = arith.constant dense<0.000000e+00> : vector<3x16xf32>
    %170 = tpu.matmul %169, %168, %cst_49 {dimension_numbers = #tpu.dot_dimension_numbers<[1], [0], [0], [1], [0, 0, 1, 1], [], []>} : vector<3x12xf32>, vector<12x16xf32>, vector<3x16xf32> -> vector<3x16xf32>
    %cst_50 = arith.constant 0.000000e+00 : f32
    %171 = vector.broadcast %cst_50 : f32 to vector<1x1xf32>
    %172 = vector.extract_strided_slice %170 {offsets = [0, 0], sizes = [3, 4], strides = [1, 1]} : vector<3x16xf32> to vector<3x4xf32>
    %173 = vector.extract_strided_slice %170 {offsets = [0, 8], sizes = [3, 4], strides = [1, 1]} : vector<3x16xf32> to vector<3x4xf32>
    %cst_51 = arith.constant dense<0.000000e+00> : vector<3xf32>
    %174 = vector.multi_reduction <add>, %172, %cst_51 [1] : vector<3x4xf32> to vector<3xf32>
    %175 = vector.shape_cast %174 : vector<3xf32> to vector<3x1xf32>
    %cst_52 = arith.constant 4.000000e+00 : f32
    %176 = vector.broadcast %cst_52 : f32 to vector<3x1xf32>
    %177 = arith.divf %175, %176 : vector<3x1xf32>
    %178 = vector.broadcast %177 : vector<3x1xf32> to vector<3x4xf32>
    %179 = arith.subf %172, %178 : vector<3x4xf32>
    %180 = arith.mulf %179, %179 : vector<3x4xf32>
    %cst_53 = arith.constant dense<0.000000e+00> : vector<3xf32>
    %181 = vector.multi_reduction <add>, %180, %cst_53 [1] : vector<3x4xf32> to vector<3xf32>
    %182 = vector.shape_cast %181 : vector<3xf32> to vector<3x1xf32>
    %cst_54 = arith.constant 3.000000e+00 : f32
    %183 = vector.broadcast %cst_54 : f32 to vector<3x1xf32>
    %184 = arith.divf %182, %183 : vector<3x1xf32>
    %185 = arith.mulf %177, %177 : vector<3x1xf32>
    %cst_55 = arith.constant 1.000000e-10 : f32
    %186 = vector.broadcast %cst_55 : f32 to vector<3x1xf32>
    %187 = arith.addf %185, %186 : vector<3x1xf32>
    %188 = arith.divf %184, %187 : vector<3x1xf32>
    %cst_56 = arith.constant dense<0.000000e+00> : vector<3xf32>
    %189 = vector.multi_reduction <add>, %173, %cst_56 [1] : vector<3x4xf32> to vector<3xf32>
    %190 = vector.shape_cast %189 : vector<3xf32> to vector<3x1xf32>
    %cst_57 = arith.constant 4.000000e+00 : f32
    %191 = vector.broadcast %cst_57 : f32 to vector<3x1xf32>
    %192 = arith.divf %190, %191 : vector<3x1xf32>
    %193 = vector.broadcast %192 : vector<3x1xf32> to vector<3x4xf32>
    %194 = arith.subf %173, %193 : vector<3x4xf32>
    %195 = arith.mulf %194, %194 : vector<3x4xf32>
    %cst_58 = arith.constant dense<0.000000e+00> : vector<3xf32>
    %196 = vector.multi_reduction <add>, %195, %cst_58 [1] : vector<3x4xf32> to vector<3xf32>
    %197 = vector.shape_cast %196 : vector<3xf32> to vector<3x1xf32>
    %cst_59 = arith.constant 3.000000e+00 : f32
    %198 = vector.broadcast %cst_59 : f32 to vector<3x1xf32>
    %199 = arith.divf %197, %198 : vector<3x1xf32>
    %200 = arith.mulf %192, %192 : vector<3x1xf32>
    %cst_60 = arith.constant 1.000000e-10 : f32
    %201 = vector.broadcast %cst_60 : f32 to vector<3x1xf32>
    %202 = arith.addf %200, %201 : vector<3x1xf32>
    %203 = arith.divf %199, %202 : vector<3x1xf32>
    %204 = arith.addf %188, %203 : vector<3x1xf32>
    %cst_61 = arith.constant dense<0.000000e+00> : vector<1xf32>
    %205 = vector.multi_reduction <add>, %204, %cst_61 [0] : vector<3x1xf32> to vector<1xf32>
    %206 = vector.shape_cast %205 : vector<1xf32> to vector<1x1xf32>
    %cst_62 = arith.constant 0.00999999977 : f32
    %207 = vector.broadcast %cst_62 : f32 to vector<1x1xf32>
    %208 = arith.mulf %207, %206 : vector<1x1xf32>
    %209 = arith.addf %171, %208 : vector<1x1xf32>
    %210 = vector.extract_strided_slice %170 {offsets = [0, 4], sizes = [3, 4], strides = [1, 1]} : vector<3x16xf32> to vector<3x4xf32>
    %211 = vector.extract_strided_slice %170 {offsets = [0, 12], sizes = [3, 4], strides = [1, 1]} : vector<3x16xf32> to vector<3x4xf32>
    %cst_63 = arith.constant dense<0.000000e+00> : vector<3xf32>
    %212 = vector.multi_reduction <add>, %210, %cst_63 [1] : vector<3x4xf32> to vector<3xf32>
    %213 = vector.shape_cast %212 : vector<3xf32> to vector<3x1xf32>
    %cst_64 = arith.constant 4.000000e+00 : f32
    %214 = vector.broadcast %cst_64 : f32 to vector<3x1xf32>
    %215 = arith.divf %213, %214 : vector<3x1xf32>
    %216 = vector.broadcast %215 : vector<3x1xf32> to vector<3x4xf32>
    %217 = arith.subf %210, %216 : vector<3x4xf32>
    %218 = arith.mulf %217, %217 : vector<3x4xf32>
    %cst_65 = arith.constant dense<0.000000e+00> : vector<3xf32>
    %219 = vector.multi_reduction <add>, %218, %cst_65 [1] : vector<3x4xf32> to vector<3xf32>
    %220 = vector.shape_cast %219 : vector<3xf32> to vector<3x1xf32>
    %cst_66 = arith.constant 3.000000e+00 : f32
    %221 = vector.broadcast %cst_66 : f32 to vector<3x1xf32>
    %222 = arith.divf %220, %221 : vector<3x1xf32>
    %223 = arith.mulf %215, %215 : vector<3x1xf32>
    %cst_67 = arith.constant 1.000000e-10 : f32
    %224 = vector.broadcast %cst_67 : f32 to vector<3x1xf32>
    %225 = arith.addf %223, %224 : vector<3x1xf32>
    %226 = arith.divf %222, %225 : vector<3x1xf32>
    %cst_68 = arith.constant dense<0.000000e+00> : vector<3xf32>
    %227 = vector.multi_reduction <add>, %211, %cst_68 [1] : vector<3x4xf32> to vector<3xf32>
    %228 = vector.shape_cast %227 : vector<3xf32> to vector<3x1xf32>
    %cst_69 = arith.constant 4.000000e+00 : f32
    %229 = vector.broadcast %cst_69 : f32 to vector<3x1xf32>
    %230 = arith.divf %228, %229 : vector<3x1xf32>
    %231 = vector.broadcast %230 : vector<3x1xf32> to vector<3x4xf32>
    %232 = arith.subf %211, %231 : vector<3x4xf32>
    %233 = arith.mulf %232, %232 : vector<3x4xf32>
    %cst_70 = arith.constant dense<0.000000e+00> : vector<3xf32>
    %234 = vector.multi_reduction <add>, %233, %cst_70 [1] : vector<3x4xf32> to vector<3xf32>
    %235 = vector.shape_cast %234 : vector<3xf32> to vector<3x1xf32>
    %cst_71 = arith.constant 3.000000e+00 : f32
    %236 = vector.broadcast %cst_71 : f32 to vector<3x1xf32>
    %237 = arith.divf %235, %236 : vector<3x1xf32>
    %238 = arith.mulf %230, %230 : vector<3x1xf32>
    %cst_72 = arith.constant 1.000000e-10 : f32
    %239 = vector.broadcast %cst_72 : f32 to vector<3x1xf32>
    %240 = arith.addf %238, %239 : vector<3x1xf32>
    %241 = arith.divf %237, %240 : vector<3x1xf32>
    %242 = arith.addf %226, %241 : vector<3x1xf32>
    %cst_73 = arith.constant dense<0.000000e+00> : vector<1xf32>
    %243 = vector.multi_reduction <add>, %242, %cst_73 [0] : vector<3x1xf32> to vector<1xf32>
    %244 = vector.shape_cast %243 : vector<1xf32> to vector<1x1xf32>
    %cst_74 = arith.constant 0.00999999977 : f32
    %245 = vector.broadcast %cst_74 : f32 to vector<1x1xf32>
    %246 = arith.mulf %245, %244 : vector<1x1xf32>
    %247 = arith.addf %209, %246 : vector<1x1xf32>
    %c0_75 = arith.constant 0 : index
    %c0_76 = arith.constant 0 : index
    %248 = vector.load %arg13[%c0_75, %c0_76] : memref<1x1xf32, #tpu.memory_space<vmem>>, vector<1x1xf32>
    tpu.vector_store %arg13[%c0_75, %c0_76], %247 {strides = array<i32>} : memref<1x1xf32, #tpu.memory_space<vmem>>, vector<1x1xf32>,
    return
  }
}

</mosaic_0001>

<llo_original>
// kernel: tpu_custom_call.1
$region0: #{tpu_custom_call.1}
  #allocation0 [shape = 'u32[]', space=smem, size = 0x4, offset = 0x4, fixed_abs, tag = 'smem constant byte address 0x4 - core index']
  #allocation1 [shape = 'u32[72,128]{1,0:T(1,128)}', space=vmem, size = 0x9000, scoped, tag = 'internal scratch']
  %s0 = inlined_call_operand.vmem [shape: f32[12,32], index: 0, kind: input, shape index: {}]
  %s1 = inlined_call_operand.vmem [shape: f32[32,32], index: 1, kind: input, shape index: {}]
  %s2 = inlined_call_operand.vmem [shape: f32[1,32], index: 2, kind: input, shape index: {}]
  %s3 = inlined_call_operand.vmem [shape: f32[32,32], index: 3, kind: input, shape index: {}]
  %s4 = inlined_call_operand.vmem [shape: f32[1,32], index: 4, kind: input, shape index: {}]
  %s5 = inlined_call_operand.vmem [shape: f32[32,264], index: 5, kind: input, shape index: {}]
  %s6 = inlined_call_operand.vmem [shape: f32[1,264], index: 6, kind: input, shape index: {}]
  %s7 = inlined_call_operand.vmem [shape: f32[256,8], index: 7, kind: input, shape index: {}]
  %s8 = inlined_call_operand.vmem [shape: f32[1,8], index: 8, kind: input, shape index: {}]
  %s9 = inlined_call_operand.vmem [shape: f32[1,2], index: 9, kind: input, shape index: {}]
  %s10 = inlined_call_operand.vmem [shape: f32[8,2], index: 10, kind: input, shape index: {}]
  %s11 = inlined_call_operand.vmem [shape: f32[3,12], index: 11, kind: input, shape index: {}]
  %s12 = inlined_call_operand.vmem [shape: f32[12,2], index: 12, kind: output, shape index: {0}]
  %s13 = inlined_call_operand.hbm [shape: f32[1,1], index: 13, kind: output, shape index: {1}]
  %14 = xla_tuple %s12, %s13
  %s15 = sld [smem:[#allocation0]]
  $region66: #{tpu_custom_call.1} parent=0
    _
  %s17 = ssub.s32 1, %s15
  %s18 = scalar_select 0, %s17, %s15
  $region1: #{tpu_custom_call.1} parent=0
    #allocation2 [shape = 'u8[512]{0}', space=vmem, size = 0x400, scoped, tag = 'output window, operand 1, single buffered']
    #allocation3 [shape = 's32[1]{0}', space=sflag, size = 0x4, scoped, tag = 'scoped memory for tpu_custom_call.1']
    %19 = vsyncpa [#allocation3], 0
    // Predicated region
    $region2: #{tpu_custom_call.1} parent=1 // pred_check
      _
    $region3: #{tpu_custom_call.1} parent=1 // pred_check_branch
      %21 = sbr.rel (0) target = $region5
    $region4: #{tpu_custom_call.1} parent=1 // pred_region
      _
    $region5: #{tpu_custom_call.1} parent=1 // pred_fallthru
      _
    // Predicated region
    $region6: #{tpu_custom_call.1} parent=1 // pred_check
      _
    $region7: #{tpu_custom_call.1} parent=1 // pred_check_branch
      %23 = sbr.rel (0) target = $region9
    $region8: #{tpu_custom_call.1} parent=1 // pred_region
      _
    $region9: #{tpu_custom_call.1} parent=1 // pred_fallthru
      _
    // Predicated region
    $region10: #{tpu_custom_call.1} parent=1 // pred_check
      _
    $region11: #{tpu_custom_call.1} parent=1 // pred_check_branch
      %25 = sbr.rel (0) target = $region13
    $region12: #{tpu_custom_call.1} parent=1 // pred_region
      _
    $region13: #{tpu_custom_call.1} parent=1 // pred_fallthru
      _
    // Predicated region
    $region14: #{tpu_custom_call.1} parent=1 // pred_check
      _
    $region15: #{tpu_custom_call.1} parent=1 // pred_check_branch
      %27 = sbr.rel (0) target = $region17
    $region16: #{tpu_custom_call.1} parent=1 // pred_region
      _
    $region17: #{tpu_custom_call.1} parent=1 // pred_fallthru
      _
    // Predicated region
    $region18: #{tpu_custom_call.1} parent=1 // pred_check
      _
    $region19: #{tpu_custom_call.1} parent=1 // pred_check_branch
      %29 = sbr.rel (0) target = $region21
    $region20: #{tpu_custom_call.1} parent=1 // pred_region
      _
    $region21: #{tpu_custom_call.1} parent=1 // pred_fallthru
      _
    // Predicated region
    $region22: #{tpu_custom_call.1} parent=1 // pred_check
      _
    $region23: #{tpu_custom_call.1} parent=1 // pred_check_branch
      %31 = sbr.rel (0) target = $region25
    $region24: #{tpu_custom_call.1} parent=1 // pred_region
      _
    $region25: #{tpu_custom_call.1} parent=1 // pred_fallthru
      _
    // Predicated region
    $region26: #{tpu_custom_call.1} parent=1 // pred_check
      _
    $region27: #{tpu_custom_call.1} parent=1 // pred_check_branch
      %33 = sbr.rel (0) target = $region29
    $region28: #{tpu_custom_call.1} parent=1 // pred_region
      _
    $region29: #{tpu_custom_call.1} parent=1 // pred_fallthru
      _
    // Predicated region
    $region30: #{tpu_custom_call.1} parent=1 // pred_check
      _
    $region31: #{tpu_custom_call.1} parent=1 // pred_check_branch
      %35 = sbr.rel (0) target = $region33
    $region32: #{tpu_custom_call.1} parent=1 // pred_region
      _
    $region33: #{tpu_custom_call.1} parent=1 // pred_fallthru
      _
    // Predicated region
    $region34: #{tpu_custom_call.1} parent=1 // pred_check
      _
    $region35: #{tpu_custom_call.1} parent=1 // pred_check_branch
      %37 = sbr.rel (0) target = $region37
    $region36: #{tpu_custom_call.1} parent=1 // pred_region
      _
    $region37: #{tpu_custom_call.1} parent=1 // pred_fallthru
      _
    // Predicated region
    $region38: #{tpu_custom_call.1} parent=1 // pred_check
      _
    $region39: #{tpu_custom_call.1} parent=1 // pred_check_branch
      %39 = sbr.rel (0) target = $region41
    $region40: #{tpu_custom_call.1} parent=1 // pred_region
      _
    $region41: #{tpu_custom_call.1} parent=1 // pred_fallthru
      _
    // Predicated region
    $region42: #{tpu_custom_call.1} parent=1 // pred_check
      _
    $region43: #{tpu_custom_call.1} parent=1 // pred_check_branch
      %41 = sbr.rel (0) target = $region45
    $region44: #{tpu_custom_call.1} parent=1 // pred_region
      _
    $region45: #{tpu_custom_call.1} parent=1 // pred_fallthru
      _
    // Predicated region
    $region46: #{tpu_custom_call.1} parent=1 // pred_check
      _
    $region47: #{tpu_custom_call.1} parent=1 // pred_check_branch
      %43 = sbr.rel (0) target = $region49
    $region48: #{tpu_custom_call.1} parent=1 // pred_region
      _
    $region49: #{tpu_custom_call.1} parent=1 // pred_fallthru
      _
    %v44 = vld [vmem:[%s0] sm:$0xff]
    %v45 = vld [vmem:[%s0 + $0x8] sm:$0xf]
    %v46 = vld [vmem:[%s1] sm:$0xff]
    %v47 = vld [vmem:[%s1 + $0x8] sm:$0xff]
    %v48 = vld [vmem:[%s1 + $0x10] sm:$0xff]
    %v49 = vld [vmem:[%s1 + $0x18] sm:$0xff]
    %v50 = vld [vmem:[%s2] sm:$0x1]
    %v52 = vperm.slane %v50, 0
    %vm54 = vcmask 261120
    %v56 = vsel %vm54, %v44, 0
    %v59 = vsel %vm54, %v45, 0
    %61 = vmatpush.msra.mxu0 0.0
    %62 = vmatpush.msra.mxu0 0.0
    %63 = vmatpush.msra.mxu0 0.0
    %64 = vmatpush.msra.mxu0 0.0
    %65 = vmatpush.msra.mxu0 0.0
    %66 = vmatpush.msra.mxu0 0.0
    %67 = vmatpush.msra.mxu0 0.0
    %68 = vmatpush.msra.mxu0 0.0
    %69 = vmatpush.msra.mxu0 0.0
    %70 = vmatpush.msra.mxu0 0.0
    %71 = vmatpush.msra.mxu0 0.0
    %72 = vmatpush.msra.mxu0 0.0
    %73 = vmatpush.msra.mxu0 %v49
    %74 = vmatpush.msra.mxu0 %v48
    %75 = vmatpush.msra.mxu0 %v47
    %76 = vmatpush.msra.mxu0 %v46
    %77 = vmatmul.f32.gmra.mxu0 %v56
    %v78 = vpop.f32.mrf.mxu0
    %v79 = vadd.f32 %v52, %v78
    %80 = vmatmul.f32.gmra.mxu0 %v59
    %v81 = vpop.f32.mrf.mxu0
    %v82 = vadd.f32 %v52, %v81
    %83 = vdwg.mxu0
    %v84 = vmax.f32 %v79, 0.0
    %v85 = vmax.f32 %v82, 0.0
    %v86 = vld [vmem:[%s3] sm:$0xff]
    %v87 = vld [vmem:[%s3 + $0x8] sm:$0xff]
    %v88 = vld [vmem:[%s3 + $0x10] sm:$0xff]
    %v89 = vld [vmem:[%s3 + $0x18] sm:$0xff]
    %v90 = vld [vmem:[%s4] sm:$0x1]
    %v92 = vperm.slane %v90, 0
    %v95 = vsel %vm54, %v84, 0
    %v98 = vsel %vm54, %v85, 0
    %100 = vmatpush.msra.mxu0 0.0
    %101 = vmatpush.msra.mxu0 0.0
    %102 = vmatpush.msra.mxu0 0.0
    %103 = vmatpush.msra.mxu0 0.0
    %104 = vmatpush.msra.mxu0 0.0
    %105 = vmatpush.msra.mxu0 0.0
    %106 = vmatpush.msra.mxu0 0.0
    %107 = vmatpush.msra.mxu0 0.0
    %108 = vmatpush.msra.mxu0 0.0
    %109 = vmatpush.msra.mxu0 0.0
    %110 = vmatpush.msra.mxu0 0.0
    %111 = vmatpush.msra.mxu0 0.0
    %112 = vmatpush.msra.mxu0 %v89
    %113 = vmatpush.msra.mxu0 %v88
    %114 = vmatpush.msra.mxu0 %v87
    %115 = vmatpush.msra.mxu0 %v86
    %116 = vmatmul.f32.gmra.mxu0 %v95
    %v117 = vpop.f32.mrf.mxu0
    %v118 = vadd.f32 %v92, %v117
    %119 = vmatmul.f32.gmra.mxu0 %v98
    %v120 = vpop.f32.mrf.mxu0
    %v121 = vadd.f32 %v92, %v120
    %122 = vdwg.mxu0
    %v123 = vld [vmem:[%s5] sm:$0xff]
    %v124 = vld [vmem:[%s5 + $0x8] sm:$0xff]
    %v125 = vld [vmem:[%s5 + $0x10] sm:$0xff]
    %v126 = vld [vmem:[%s5 + $0x18] sm:$0xff]
    %v127 = vld [vmem:[%s5 + $0x20] sm:$0xff]
    %v128 = vld [vmem:[%s5 + $0x28] sm:$0xff]
    %v129 = vld [vmem:[%s5 + $0x30] sm:$0xff]
    %v130 = vld [vmem:[%s5 + $0x38] sm:$0xff]
    %v131 = vld [vmem:[%s5 + $0x40] sm:$0xff]
    %v132 = vld [vmem:[%s5 + $0x48] sm:$0xff]
    %v133 = vld [vmem:[%s5 + $0x50] sm:$0xff]
    %v134 = vld [vmem:[%s5 + $0x58] sm:$0xff]
    %v135 = vld [vmem:[%s6] sm:$0x7]
    %v137 = vperm.slane %v135, 0
    %v138 = vperm.slane %v135, 1
    %v139 = vperm.slane %v135, 2
    %v144 = vsel %vm54, %v118, 0
    %v147 = vsel %vm54, %v121, 0
    %149 = vmatpush.msra.mxu0 0.0
    %150 = vmatpush.msra.mxu0 0.0
    %151 = vmatpush.msra.mxu0 0.0
    %152 = vmatpush.msra.mxu0 0.0
    %153 = vmatpush.msra.mxu0 0.0
    %154 = vmatpush.msra.mxu0 0.0
    %155 = vmatpush.msra.mxu0 0.0
    %156 = vmatpush.msra.mxu0 0.0
    %157 = vmatpush.msra.mxu0 0.0
    %158 = vmatpush.msra.mxu0 0.0
    %159 = vmatpush.msra.mxu0 0.0
    %160 = vmatpush.msra.mxu0 0.0
    %161 = vmatpush.msra.mxu0 %v132
    %162 = vmatpush.msra.mxu0 %v129
    %163 = vmatpush.msra.mxu0 %v126
    %164 = vmatpush.msra.mxu0 %v123
    %165 = vmatmul.f32.gmra.mxu0 %v144
    %v166 = vpop.f32.mrf.mxu0
    %v167 = vadd.f32 %v137, %v166
    %168 = vmatmul.f32.gmra.mxu0 %v147
    %v169 = vpop.f32.mrf.mxu0
    %v170 = vadd.f32 %v137, %v169
    %171 = vdwg.mxu0
    %172 = vmatpush.msra.mxu0 0.0
    %173 = vmatpush.msra.mxu0 0.0
    %174 = vmatpush.msra.mxu0 0.0
    %175 = vmatpush.msra.mxu0 0.0
    %176 = vmatpush.msra.mxu0 0.0
    %177 = vmatpush.msra.mxu0 0.0
    %178 = vmatpush.msra.mxu0 0.0
    %179 = vmatpush.msra.mxu0 0.0
    %180 = vmatpush.msra.mxu0 0.0
    %181 = vmatpush.msra.mxu0 0.0
    %182 = vmatpush.msra.mxu0 0.0
    %183 = vmatpush.msra.mxu0 0.0
    %184 = vmatpush.msra.mxu0 %v133
    %185 = vmatpush.msra.mxu0 %v130
    %186 = vmatpush.msra.mxu0 %v127
    %187 = vmatpush.msra.mxu0 %v124
    %188 = vmatmul.f32.gmra.mxu0 %v144
    %v189 = vpop.f32.mrf.mxu0
    %v190 = vadd.f32 %v138, %v189
    %191 = vmatmul.f32.gmra.mxu0 %v147
    %v192 = vpop.f32.mrf.mxu0
    %v193 = vadd.f32 %v138, %v192
    %194 = vdwg.mxu0
    %195 = vmatpush.msra.mxu0 0.0
    %196 = vmatpush.msra.mxu0 0.0
    %197 = vmatpush.msra.mxu0 0.0
    %198 = vmatpush.msra.mxu0 0.0
    %199 = vmatpush.msra.mxu0 0.0
    %200 = vmatpush.msra.mxu0 0.0
    %201 = vmatpush.msra.mxu0 0.0
    %202 = vmatpush.msra.mxu0 0.0
    %203 = vmatpush.msra.mxu0 0.0
    %204 = vmatpush.msra.mxu0 0.0
    %205 = vmatpush.msra.mxu0 0.0
    %206 = vmatpush.msra.mxu0 0.0
    %207 = vmatpush.msra.mxu0 %v134
    %208 = vmatpush.msra.mxu0 %v131
    %209 = vmatpush.msra.mxu0 %v128
    %210 = vmatpush.msra.mxu0 %v125
    %211 = vmatmul.f32.gmra.mxu0 %v144
    %v212 = vpop.f32.mrf.mxu0
    %v213 = vadd.f32 %v139, %v212
    %214 = vmatmul.f32.gmra.mxu0 %v147
    %v215 = vpop.f32.mrf.mxu0
    %v216 = vadd.f32 %v139, %v215
    %217 = vdwg.mxu0
    %v218 = vmax.f32 %v167, 0.0
    %v219 = vmax.f32 %v190, 0.0
    %v220 = vmax.f32 %v170, 0.0
    %v221 = vmax.f32 %v193, 0.0
    %v222 = vld [vmem:[%s7] sm:$0xff]
    %v223 = vld [vmem:[%s7 + $0x8] sm:$0xff]
    %v224 = vld [vmem:[%s7 + $0x10] sm:$0xff]
    %v225 = vld [vmem:[%s7 + $0x18] sm:$0xff]
    %v226 = vld [vmem:[%s7 + $0x20] sm:$0xff]
    %v227 = vld [vmem:[%s7 + $0x28] sm:$0xff]
    %v228 = vld [vmem:[%s7 + $0x30] sm:$0xff]
    %v229 = vld [vmem:[%s7 + $0x38] sm:$0xff]
    %v230 = vld [vmem:[%s7 + $0x40] sm:$0xff]
    %v231 = vld [vmem:[%s7 + $0x48] sm:$0xff]
    %v232 = vld [vmem:[%s7 + $0x50] sm:$0xff]
    %v233 = vld [vmem:[%s7 + $0x58] sm:$0xff]
    %v234 = vld [vmem:[%s7 + $0x60] sm:$0xff]
    %v235 = vld [vmem:[%s7 + $0x68] sm:$0xff]
    %v236 = vld [vmem:[%s7 + $0x70] sm:$0xff]
    %v237 = vld [vmem:[%s7 + $0x78] sm:$0xff]
    %v238 = vld [vmem:[%s7 + $0x80] sm:$0xff]
    %v239 = vld [vmem:[%s7 + $0x88] sm:$0xff]
    %v240 = vld [vmem:[%s7 + $0x90] sm:$0xff]
    %v241 = vld [vmem:[%s7 + $0x98] sm:$0xff]
    %v242 = vld [vmem:[%s7 + $0xa0] sm:$0xff]
    %v243 = vld [vmem:[%s7 + $0xa8] sm:$0xff]
    %v244 = vld [vmem:[%s7 + $0xb0] sm:$0xff]
    %v245 = vld [vmem:[%s7 + $0xb8] sm:$0xff]
    %v246 = vld [vmem:[%s7 + $0xc0] sm:$0xff]
    %v247 = vld [vmem:[%s7 + $0xc8] sm:$0xff]
    %v248 = vld [vmem:[%s7 + $0xd0] sm:$0xff]
    %v249 = vld [vmem:[%s7 + $0xd8] sm:$0xff]
    %v250 = vld [vmem:[%s7 + $0xe0] sm:$0xff]
    %v251 = vld [vmem:[%s7 + $0xe8] sm:$0xff]
    %v252 = vld [vmem:[%s7 + $0xf0] sm:$0xff]
    %v253 = vld [vmem:[%s7 + $0xf8] sm:$0xff]
    %v254 = vld [vmem:[%s8] sm:$0x1]
    %v256 = vperm.slane %v254, 0
    %258 = vmatpush.msra.mxu0 %v237
    %259 = vmatpush.msra.mxu0 %v236
    %260 = vmatpush.msra.mxu0 %v235
    %261 = vmatpush.msra.mxu0 %v234
    %262 = vmatpush.msra.mxu0 %v233
    %263 = vmatpush.msra.mxu0 %v232
    %264 = vmatpush.msra.mxu0 %v231
    %265 = vmatpush.msra.mxu0 %v230
    %266 = vmatpush.msra.mxu0 %v229
    %267 = vmatpush.msra.mxu0 %v228
    %268 = vmatpush.msra.mxu0 %v227
    %269 = vmatpush.msra.mxu0 %v226
    %270 = vmatpush.msra.mxu0 %v225
    %271 = vmatpush.msra.mxu0 %v224
    %272 = vmatpush.msra.mxu0 %v223
    %273 = vmatpush.msra.mxu0 %v222
    %274 = vmatmul.f32.gmra.mxu0 %v218
    %v275 = vpop.f32.mrf.mxu0
    %v276 = vadd.f32 %v256, %v275
    %277 = vmatmul.f32.gmra.mxu0 %v220
    %v278 = vpop.f32.mrf.mxu0
    %v279 = vadd.f32 %v256, %v278
    %280 = vdwg.mxu0
    %281 = vmatpush.msra.mxu0 %v253
    %282 = vmatpush.msra.mxu0 %v252
    %283 = vmatpush.msra.mxu0 %v251
    %284 = vmatpush.msra.mxu0 %v250
    %285 = vmatpush.msra.mxu0 %v249
    %286 = vmatpush.msra.mxu0 %v248
    %287 = vmatpush.msra.mxu0 %v247
    %288 = vmatpush.msra.mxu0 %v246
    %289 = vmatpush.msra.mxu0 %v245
    %290 = vmatpush.msra.mxu0 %v244
    %291 = vmatpush.msra.mxu0 %v243
    %292 = vmatpush.msra.mxu0 %v242
    %293 = vmatpush.msra.mxu0 %v241
    %294 = vmatpush.msra.mxu0 %v240
    %295 = vmatpush.msra.mxu0 %v239
    %296 = vmatpush.msra.mxu0 %v238
    %297 = vmatmul.f32.gmra.mxu0 %v219
    %v298 = vpop.f32.mrf.mxu0
    %v299 = vadd.f32 %v276, %v298
    %300 = vmatmul.f32.gmra.mxu0 %v221
    %v301 = vpop.f32.mrf.mxu0
    %v302 = vadd.f32 %v279, %v301
    %303 = vdwg.mxu0
    %v304 = vlaneseq
    %v305 = vand.u32 %v304, 127
    %307 = vset.pattern.permute.xlu0 0
    %308 = vperm.xlu0 %307, %v213
    %v309 = vpop.permute.xlu0 %308
    %312 = vset.pattern.permute.xlu0 0
    %313 = vperm.xlu0 %312, %v216
    %v314 = vpop.permute.xlu0 %313
    %vm316 = vcmp.gt.f32.partialorder %v309, %v213
    %vm317 = vcmp.gt.f32.partialorder %v314, %v216
    %vm318 = vcmp.eq.f32.partialorder %v309, %v213
    %vm319 = vcmp.eq.f32.partialorder %v314, %v216
    %vm320 = vcmp.gt.s32.totalorder %v305, 0
    %vm321 = vmand %vm318, %vm320
    %vm322 = vmand %vm319, %vm320
    %vm323 = vmor %vm316, %vm321
    %vm324 = vmor %vm317, %vm322
    %v325 = vsel %vm323, 1, 0
    %v326 = vsel %vm324, 1, 0
    %327 = vset.pattern.permute.xlu0 1
    %328 = vperm.xlu0 %327, %v213
    %v329 = vpop.permute.xlu0 %328
    %331 = vset.pattern.permute.xlu0 1
    %332 = vperm.xlu0 %331, %v216
    %v333 = vpop.permute.xlu0 %332
    %vm335 = vcmp.gt.f32.partialorder %v329, %v213
    %vm336 = vcmp.gt.f32.partialorder %v333, %v216
    %vm337 = vcmp.eq.f32.partialorder %v329, %v213
    %vm338 = vcmp.eq.f32.partialorder %v333, %v216
    %vm339 = vcmp.gt.s32.totalorder %v305, 1
    %vm340 = vmand %vm337, %vm339
    %vm341 = vmand %vm338, %vm339
    %vm342 = vmor %vm335, %vm340
    %vm343 = vmor %vm336, %vm341
    %v344 = vsel %vm342, 1, 0
    %v345 = vsel %vm343, 1, 0
    %v346 = vadd.s32 %v325, %v344
    %v347 = vadd.s32 %v326, %v345
    %348 = vset.pattern.permute.xlu0 2
    %349 = vperm.xlu0 %348, %v213
    %v350 = vpop.permute.xlu0 %349
    %352 = vset.pattern.permute.xlu0 2
    %353 = vperm.xlu0 %352, %v216
    %v354 = vpop.permute.xlu0 %353
    %vm356 = vcmp.gt.f32.partialorder %v350, %v213
    %vm357 = vcmp.gt.f32.partialorder %v354, %v216
    %vm358 = vcmp.eq.f32.partialorder %v350, %v213
    %vm359 = vcmp.eq.f32.partialorder %v354, %v216
    %vm360 = vcmp.gt.s32.totalorder %v305, 2
    %vm361 = vmand %vm358, %vm360
    %vm362 = vmand %vm359, %vm360
    %vm363 = vmor %vm356, %vm361
    %vm364 = vmor %vm357, %vm362
    %v365 = vsel %vm363, 1, 0
    %v366 = vsel %vm364, 1, 0
    %v367 = vadd.s32 %v346, %v365
    %v368 = vadd.s32 %v347, %v366
    %369 = vset.pattern.permute.xlu0 3
    %370 = vperm.xlu0 %369, %v213
    %v371 = vpop.permute.xlu0 %370
    %373 = vset.pattern.permute.xlu0 3
    %374 = vperm.xlu0 %373, %v216
    %v375 = vpop.permute.xlu0 %374
    %vm377 = vcmp.gt.f32.partialorder %v371, %v213
    %vm378 = vcmp.gt.f32.partialorder %v375, %v216
    %vm379 = vcmp.eq.f32.partialorder %v371, %v213
    %vm380 = vcmp.eq.f32.partialorder %v375, %v216
    %vm381 = vcmp.gt.s32.totalorder %v305, 3
    %vm382 = vmand %vm379, %vm381
    %vm383 = vmand %vm380, %vm381
    %vm384 = vmor %vm377, %vm382
    %vm385 = vmor %vm378, %vm383
    %v386 = vsel %vm384, 1, 0
    %v387 = vsel %vm385, 1, 0
    %v388 = vadd.s32 %v367, %v386
    %v389 = vadd.s32 %v368, %v387
    %vm390 = vcmp.lt.s32.totalorder %v388, 2
    %vm391 = vcmp.lt.s32.totalorder %v389, 2
    %v392 = vsel %vm390, %v213, -1e+30
    %v393 = vsel %vm391, %v216, -1e+30
    %vm394 = vcmask 31744
    %v395 = vsel %vm394, %v392, -inf
    %396 = vmax.xlane.f32.xlu0 %v395
    %v397 = vpop.xlane.xlu0 %396
    %vm398 = vcmask 27648
    %v399 = vsel %vm398, %v393, -inf
    %400 = vmax.xlane.f32.xlu0 %v399
    %v401 = vpop.xlane.xlu0 %400
    %v402 = vsub.f32 %v213, %v397
    %v403 = vsub.f32 %v216, %v401
    %v404 = vmul.f32 %v402, 1.442695
    %v405 = vpow.pop %v404
    %v406 = vmul.f32 %v403, 1.442695
    %v407 = vpow.pop %v406
    %v408 = vsel %vm390, %v405, 0.0
    %v409 = vsel %vm391, %v407, 0.0
    %v410 = vsel %vm394, %v408, 0.0
    %411 = vadd.xlane.f32.xlu0 %v410
    %v412 = vpop.xlane.xlu0 %411
    %v413 = vsel %vm398, %v409, 0.0
    %414 = vadd.xlane.f32.xlu0 %v413
    %v415 = vpop.xlane.xlu0 %414
    %v416 = vrcp.pop %v412
    %v417 = vmul.f32 %v412, %v416
    %v418 = vsub.f32 1.0, %v417
    %v419 = vmul.f32 %v416, %v418
    %v420 = vadd.f32 %v416, %v419
    %vm421 = vweird.f32 %v412
    %vm422 = vweird.f32 %v416
    %vm423 = vmor %vm421, %vm422
    %v424 = vsel %vm423, %v416, %v420
    %v425 = vand.u32 2147483647, %v412
    %vm426 = vcmp.eq.f32.partialorder %v425, 8.507059e+37
    %v427 = vand.u32 %v412, 2147483648
    %v428 = vor.u32 1.1754944e-38, %v427
    %v429 = vsel %vm426, %v428, %v424
    %v430 = vmul.f32 %v408, %v429
    %v431 = vrcp.pop %v415
    %v432 = vmul.f32 %v415, %v431
    %v433 = vsub.f32 1.0, %v432
    %v434 = vmul.f32 %v431, %v433
    %v435 = vadd.f32 %v431, %v434
    %vm436 = vweird.f32 %v415
    %vm437 = vweird.f32 %v431
    %vm438 = vmor %vm436, %vm437
    %v439 = vsel %vm438, %v431, %v435
    %v440 = vand.u32 2147483647, %v415
    %vm441 = vcmp.eq.f32.partialorder %v440, 8.507059e+37
    %v442 = vand.u32 %v415, 2147483648
    %v443 = vor.u32 1.1754944e-38, %v442
    %v444 = vsel %vm441, %v443, %v439
    %v445 = vmul.f32 %v409, %v444
    %446 = vset.pattern.permute.xlu0 4
    %447 = vperm.xlu0 %446, %v213
    %v448 = vpop.permute.xlu0 %447
    %450 = vset.pattern.permute.xlu0 4
    %451 = vperm.xlu0 %450, %v216
    %v452 = vpop.permute.xlu0 %451
    %vm454 = vcmp.gt.f32.partialorder %v448, %v213
    %vm455 = vcmp.gt.f32.partialorder %v452, %v216
    %vm456 = vcmp.eq.f32.partialorder %v448, %v213
    %vm457 = vcmp.eq.f32.partialorder %v452, %v216
    %v458 = vsel %vm320, 1, 0
    %459 = vrot.lane.b32.xlu0 %v458, 4
    %v460 = vpop.permute.xlu0 %459
    %vm461 = vcmp.ne.s32.totalorder %v460, 0
    %vm462 = vmand %vm456, %vm461
    %vm463 = vmand %vm457, %vm461
    %vm464 = vmor %vm454, %vm462
    %vm465 = vmor %vm455, %vm463
    %v466 = vsel %vm464, 1, 0
    %v467 = vsel %vm465, 1, 0
    %468 = vset.pattern.permute.xlu0 5
    %469 = vperm.xlu0 %468, %v213
    %v470 = vpop.permute.xlu0 %469
    %472 = vset.pattern.permute.xlu0 5
    %473 = vperm.xlu0 %472, %v216
    %v474 = vpop.permute.xlu0 %473
    %vm476 = vcmp.gt.f32.partialorder %v470, %v213
    %vm477 = vcmp.gt.f32.partialorder %v474, %v216
    %vm478 = vcmp.eq.f32.partialorder %v470, %v213
    %vm479 = vcmp.eq.f32.partialorder %v474, %v216
    %v480 = vsel %vm339, 1, 0
    %481 = vrot.lane.b32.xlu0 %v480, 4
    %v482 = vpop.permute.xlu0 %481
    %vm483 = vcmp.ne.s32.totalorder %v482, 0
    %vm484 = vmand %vm478, %vm483
    %vm485 = vmand %vm479, %vm483
    %vm486 = vmor %vm476, %vm484
    %vm487 = vmor %vm477, %vm485
    %v488 = vsel %vm486, 1, 0
    %v489 = vsel %vm487, 1, 0
    %v490 = vadd.s32 %v466, %v488
    %v491 = vadd.s32 %v467, %v489
    %492 = vset.pattern.permute.xlu0 6
    %493 = vperm.xlu0 %492, %v213
    %v494 = vpop.permute.xlu0 %493
    %496 = vset.pattern.permute.xlu0 6
    %497 = vperm.xlu0 %496, %v216
    %v498 = vpop.permute.xlu0 %497
    %vm500 = vcmp.gt.f32.partialorder %v494, %v213
    %vm501 = vcmp.gt.f32.partialorder %v498, %v216
    %vm502 = vcmp.eq.f32.partialorder %v494, %v213
    %vm503 = vcmp.eq.f32.partialorder %v498, %v216
    %v504 = vsel %vm360, 1, 0
    %505 = vrot.lane.b32.xlu0 %v504, 4
    %v506 = vpop.permute.xlu0 %505
    %vm507 = vcmp.ne.s32.totalorder %v506, 0
    %vm508 = vmand %vm502, %vm507
    %vm509 = vmand %vm503, %vm507
    %vm510 = vmor %vm500, %vm508
    %vm511 = vmor %vm501, %vm509
    %v512 = vsel %vm510, 1, 0
    %v513 = vsel %vm511, 1, 0
    %v514 = vadd.s32 %v490, %v512
    %v515 = vadd.s32 %v491, %v513
    %516 = vset.pattern.permute.xlu0 7
    %517 = vperm.xlu0 %516, %v213
    %v518 = vpop.permute.xlu0 %517
    %520 = vset.pattern.permute.xlu0 7
    %521 = vperm.xlu0 %520, %v216
    %v522 = vpop.permute.xlu0 %521
    %vm524 = vcmp.gt.f32.partialorder %v518, %v213
    %vm525 = vcmp.gt.f32.partialorder %v522, %v216
    %vm526 = vcmp.eq.f32.partialorder %v518, %v213
    %vm527 = vcmp.eq.f32.partialorder %v522, %v216
    %v528 = vsel %vm381, 1, 0
    %529 = vrot.lane.b32.xlu0 %v528, 4
    %v530 = vpop.permute.xlu0 %529
    %vm531 = vcmp.ne.s32.totalorder %v530, 0
    %vm532 = vmand %vm526, %vm531
    %vm533 = vmand %vm527, %vm531
    %vm534 = vmor %vm524, %vm532
    %vm535 = vmor %vm525, %vm533
    %v536 = vsel %vm534, 1, 0
    %v537 = vsel %vm535, 1, 0
    %v538 = vadd.s32 %v514, %v536
    %v539 = vadd.s32 %v515, %v537
    %vm540 = vcmp.lt.s32.totalorder %v538, 2
    %vm541 = vcmp.lt.s32.totalorder %v539, 2
    %v542 = vsel %vm540, %v213, -1e+30
    %v543 = vsel %vm541, %v216, -1e+30
    %vm544 = vcmask 64544
    %v545 = vsel %vm544, %v542, -inf
    %546 = vmax.xlane.f32.xlu0 %v545
    %v547 = vpop.xlane.xlu0 %546
    %vm548 = vcmask 60448
    %v549 = vsel %vm548, %v543, -inf
    %550 = vmax.xlane.f32.xlu0 %v549
    %v551 = vpop.xlane.xlu0 %550
    %v552 = vsub.f32 %v213, %v547
    %v553 = vsub.f32 %v216, %v551
    %v554 = vmul.f32 %v552, 1.442695
    %v555 = vpow.pop %v554
    %v556 = vmul.f32 %v553, 1.442695
    %v557 = vpow.pop %v556
    %v558 = vsel %vm540, %v555, 0.0
    %v559 = vsel %vm541, %v557, 0.0
    %562 = vrot.lane.b32.xlu0 %v558, 124
    %v563 = vpop.permute.xlu0 %562
    %564 = vrot.lane.b32.xlu0 %v559, 124
    %v565 = vpop.permute.xlu0 %564
    %v568 = vsel %vm394, %v563, 0.0
    %569 = vadd.xlane.f32.xlu0 %v568
    %v570 = vpop.xlane.xlu0 %569
    %v571 = vsel %vm398, %v565, 0.0
    %572 = vadd.xlane.f32.xlu0 %v571
    %v573 = vpop.xlane.xlu0 %572
    %v574 = vrcp.pop %v570
    %v575 = vmul.f32 %v570, %v574
    %v576 = vsub.f32 1.0, %v575
    %v577 = vmul.f32 %v574, %v576
    %v578 = vadd.f32 %v574, %v577
    %vm579 = vweird.f32 %v570
    %vm580 = vweird.f32 %v574
    %vm581 = vmor %vm579, %vm580
    %v582 = vsel %vm581, %v574, %v578
    %v583 = vand.u32 2147483647, %v570
    %vm584 = vcmp.eq.f32.partialorder %v583, 8.507059e+37
    %v585 = vand.u32 %v570, 2147483648
    %v586 = vor.u32 1.1754944e-38, %v585
    %v587 = vsel %vm584, %v586, %v582
    %v588 = vmul.f32 %v558, %v587
    %v589 = vrcp.pop %v573
    %v590 = vmul.f32 %v573, %v589
    %v591 = vsub.f32 1.0, %v590
    %v592 = vmul.f32 %v589, %v591
    %v593 = vadd.f32 %v589, %v592
    %vm594 = vweird.f32 %v573
    %vm595 = vweird.f32 %v589
    %vm596 = vmor %vm594, %vm595
    %v597 = vsel %vm596, %v589, %v593
    %v598 = vand.u32 2147483647, %v573
    %vm599 = vcmp.eq.f32.partialorder %v598, 8.507059e+37
    %v600 = vand.u32 %v573, 2147483648
    %v601 = vor.u32 1.1754944e-38, %v600
    %v602 = vsel %vm599, %v601, %v597
    %v603 = vmul.f32 %v559, %v602
    %v604 = vsel %vm394, %v430, %v588
    %v605 = vsel %vm394, %v445, %v603
    %v606 = vmul.f32 %v604, %v299
    %v607 = vmul.f32 %v605, %v302
    %v608 = vld [vmem:[%s10] sm:$0xff]
    %v609 = vld [vmem:[%s9] sm:$0x1]
    %v611 = vperm.slane %v609, 0
    %vm613 = vcmask 64512
    %v615 = vsel %vm613, %v606, 0
    %v618 = vsel %vm613, %v607, 0
    %620 = vmatpush.msra.mxu0 0.0
    %621 = vmatpush.msra.mxu0 0.0
    %622 = vmatpush.msra.mxu0 0.0
    %623 = vmatpush.msra.mxu0 0.0
    %624 = vmatpush.msra.mxu0 0.0
    %625 = vmatpush.msra.mxu0 0.0
    %626 = vmatpush.msra.mxu0 0.0
    %627 = vmatpush.msra.mxu0 0.0
    %628 = vmatpush.msra.mxu0 0.0
    %629 = vmatpush.msra.mxu0 0.0
    %630 = vmatpush.msra.mxu0 0.0
    %631 = vmatpush.msra.mxu0 0.0
    %632 = vmatpush.msra.mxu0 0.0
    %633 = vmatpush.msra.mxu0 0.0
    %634 = vmatpush.msra.mxu0 0.0
    %635 = vmatpush.msra.mxu0 %v608
    %636 = vmatmul.f32.gmra.mxu0 %v615
    %v637 = vpop.f32.mrf.mxu0
    %v638 = vadd.f32 %v611, %v637
    %639 = vmatmul.f32.gmra.mxu0 %v618
    %v640 = vpop.f32.mrf.mxu0
    %v641 = vadd.f32 %v611, %v640
    %642 = vdwg.mxu0
    %v643 = vxor.u32 %v638, 2147483648
    %v644 = vxor.u32 %v641, 2147483648
    %v645 = vmul.f32 %v643, 1.442695
    %v646 = vpow.pop %v645
    %v647 = vmul.f32 %v644, 1.442695
    %v648 = vpow.pop %v647
    %v649 = vadd.f32 %v646, 1.0
    %v650 = vadd.f32 %v648, 1.0
    %v651 = vrcp.pop %v649
    %v652 = vmul.f32 %v649, %v651
    %v653 = vsub.f32 1.0, %v652
    %v654 = vmul.f32 %v651, %v653
    %v655 = vadd.f32 %v651, %v654
    %vm656 = vweird.f32 %v649
    %vm657 = vweird.f32 %v651
    %vm658 = vmor %vm656, %vm657
    %v659 = vsel %vm658, %v651, %v655
    %v660 = vand.u32 2147483647, %v649
    %vm661 = vcmp.eq.f32.partialorder %v660, 8.507059e+37
    %v662 = vand.u32 %v649, 2147483648
    %v663 = vor.u32 1.1754944e-38, %v662
    %v664 = vsel %vm661, %v663, %v659
    %v665 = vmul.f32 1.0, %v664
    %v666 = vrcp.pop %v650
    %v667 = vmul.f32 %v650, %v666
    %v668 = vsub.f32 1.0, %v667
    %v669 = vmul.f32 %v666, %v668
    %v670 = vadd.f32 %v666, %v669
    %vm671 = vweird.f32 %v650
    %vm672 = vweird.f32 %v666
    %vm673 = vmor %vm671, %vm672
    %v674 = vsel %vm673, %v666, %v670
    %v675 = vand.u32 2147483647, %v650
    %vm676 = vcmp.eq.f32.partialorder %v675, 8.507059e+37
    %v677 = vand.u32 %v650, 2147483648
    %v678 = vor.u32 1.1754944e-38, %v677
    %v679 = vsel %vm676, %v678, %v674
    %v680 = vmul.f32 1.0, %v679
    %vm681 = vcmask 15360
    %682 = vst.msk [vmem:[%s12] sm:$0xff] %vm681, %v665
    %vm683 = vcmask 11264
    %684 = vst.msk [vmem:[%s12 + $0x8] sm:$0xf] %vm683, %v680
    %vm685 = vcmp.gt.f32.partialorder %v604, 0.0
    %vm686 = vcmp.gt.f32.partialorder %v605, 0.0
    %v687 = vsel %vm685, 1, 0
    %v688 = vsel %vm686, 1, 0
    %v689 = vcvt.s32.f32 %v687
    %v690 = vcvt.s32.f32 %v688
    %693 = vrot.lane.b32.xlu0 %v689, 8
    %v694 = vpop.permute.xlu0 %693
    %695 = vrot.lane.b32.xlu0 %v690, 8
    %v696 = vpop.permute.xlu0 %695
    %v699 = vsel %vm613, %v604, %v694
    %v700 = vsel %vm613, %v605, %v696
    %v701 = vld [vmem:[%s11] sm:$0x7]
    %vm702 = vcmask 97280
    %v704 = vsel %vm702, %v701, 0
    %vm706 = vcmask 1043456
    %v708 = vsel %vm706, %v700, 0
    %710 = vmatpush.msra.mxu0 0.0
    %711 = vmatpush.msra.mxu0 0.0
    %712 = vmatpush.msra.mxu0 0.0
    %713 = vmatpush.msra.mxu0 0.0
    %714 = vmatpush.msra.mxu0 0.0
    %715 = vmatpush.msra.mxu0 0.0
    %716 = vmatpush.msra.mxu0 0.0
    %717 = vmatpush.msra.mxu0 0.0
    %718 = vmatpush.msra.mxu0 0.0
    %719 = vmatpush.msra.mxu0 0.0
    %720 = vmatpush.msra.mxu0 0.0
    %721 = vmatpush.msra.mxu0 0.0
    %722 = vmatpush.msra.mxu0 0.0
    %723 = vmatpush.msra.mxu0 0.0
    %724 = vmatpush.msra.mxu0 %v708
    %725 = vmatpush.msra.mxu0 %v699
    %726 = vmatmul.f32.gmra.mxu0 %v704
    %v727 = vpop.f32.mrf.mxu0
    %v728 = vadd.f32 0.0, %v727
    %729 = vdwg.mxu0
    %vm730 = vcmask 26624
    %v731 = vsel %vm730, %v728, 0.0
    %732 = vadd.xlane.f32.xlu0 %v731
    %v733 = vpop.xlane.xlu0 %732
    %v734 = vrcp.pop 4.0
    %v735 = vmul.f32 4.0, %v734
    %v736 = vsub.f32 1.0, %v735
    %v737 = vmul.f32 %v734, %v736
    %v738 = vadd.f32 %v734, %v737
    %vm739 = vweird.f32 %v734
    %v740 = vsel %vm739, %v734, %v738
    %v741 = vmul.f32 %v733, %v740
    %v742 = vsub.f32 %v728, %v741
    %v743 = vmul.f32 %v742, %v742
    %v744 = vsel %vm730, %v743, 0.0
    %745 = vadd.xlane.f32.xlu0 %v744
    %v746 = vpop.xlane.xlu0 %745
    %v747 = vrcp.pop 3.0
    %v748 = vmul.f32 3.0, %v747
    %v749 = vsub.f32 1.0, %v748
    %v750 = vmul.f32 %v747, %v749
    %v751 = vadd.f32 %v747, %v750
    %vm752 = vweird.f32 %v747
    %v753 = vsel %vm752, %v747, %v751
    %v754 = vmul.f32 %v746, %v753
    %v755 = vmul.f32 %v741, %v741
    %v756 = vadd.f32 %v755, 1e-10
    %v757 = vrcp.pop %v756
    %v758 = vmul.f32 %v756, %v757
    %v759 = vsub.f32 1.0, %v758
    %v760 = vmul.f32 %v757, %v759
    %v761 = vadd.f32 %v757, %v760
    %vm762 = vweird.f32 %v756
    %vm763 = vweird.f32 %v757
    %vm764 = vmor %vm762, %vm763
    %v765 = vsel %vm764, %v757, %v761
    %v766 = vand.u32 2147483647, %v756
    %vm767 = vcmp.eq.f32.partialorder %v766, 8.507059e+37
    %v768 = vand.u32 %v756, 2147483648
    %v769 = vor.u32 1.1754944e-38, %v768
    %v770 = vsel %vm767, %v769, %v765
    %v771 = vmul.f32 %v754, %v770
    %773 = vrot.lane.b32.xlu0 %v728, 120
    %v774 = vpop.permute.xlu0 %773
    %v776 = vsel %vm730, %v774, 0.0
    %777 = vadd.xlane.f32.xlu0 %v776
    %v778 = vpop.xlane.xlu0 %777
    %v779 = vmul.f32 %v778, %v740
    %v780 = vsub.f32 %v728, %v779
    %v781 = vmul.f32 %v780, %v780
    %783 = vrot.lane.b32.xlu0 %v781, 120
    %v784 = vpop.permute.xlu0 %783
    %v786 = vsel %vm730, %v784, 0.0
    %787 = vadd.xlane.f32.xlu0 %v786
    %v788 = vpop.xlane.xlu0 %787
    %v789 = vmul.f32 %v788, %v753
    %v790 = vmul.f32 %v779, %v779
    %v791 = vadd.f32 %v790, 1e-10
    %v792 = vrcp.pop %v791
    %v793 = vmul.f32 %v791, %v792
    %v794 = vsub.f32 1.0, %v793
    %v795 = vmul.f32 %v792, %v794
    %v796 = vadd.f32 %v792, %v795
    %vm797 = vweird.f32 %v791
    %vm798 = vweird.f32 %v792
    %vm799 = vmor %vm797, %vm798
    %v800 = vsel %vm799, %v792, %v796
    %v801 = vand.u32 2147483647, %v791
    %vm802 = vcmp.eq.f32.partialorder %v801, 8.507059e+37
    %v803 = vand.u32 %v791, 2147483648
    %v804 = vor.u32 1.1754944e-38, %v803
    %v805 = vsel %vm802, %v804, %v800
    %v806 = vmul.f32 %v789, %v805
    %v807 = vadd.f32 %v771, %v806
    %vm808 = vcmask 1042432
    %v809 = vsel %vm808, %v807, 0.0
    %v810 = vrot.slane %v809, 4
    %v811 = vadd.f32 %v809, %v810
    %v812 = vrot.slane %v811, 2
    %v813 = vadd.f32 %v811, %v812
    %v814 = vrot.slane %v813, 1
    %v815 = vadd.f32 %v813, %v814
    %v816 = vmul.f32 %v815, 0.01
    %v817 = vadd.f32 %v816, 0.0
    %818 = vrot.lane.b32.xlu0 %v728, 124
    %v819 = vpop.permute.xlu0 %818
    %v821 = vsel %vm730, %v819, 0.0
    %822 = vadd.xlane.f32.xlu0 %v821
    %v823 = vpop.xlane.xlu0 %822
    %v824 = vmul.f32 %v823, %v740
    %v825 = vsub.f32 %v728, %v824
    %v826 = vmul.f32 %v825, %v825
    %828 = vrot.lane.b32.xlu0 %v826, 124
    %v829 = vpop.permute.xlu0 %828
    %v831 = vsel %vm730, %v829, 0.0
    %832 = vadd.xlane.f32.xlu0 %v831
    %v833 = vpop.xlane.xlu0 %832
    %v834 = vmul.f32 %v833, %v753
    %v835 = vmul.f32 %v824, %v824
    %v836 = vadd.f32 %v835, 1e-10
    %v837 = vrcp.pop %v836
    %v838 = vmul.f32 %v836, %v837
    %v839 = vsub.f32 1.0, %v838
    %v840 = vmul.f32 %v837, %v839
    %v841 = vadd.f32 %v837, %v840
    %vm842 = vweird.f32 %v836
    %vm843 = vweird.f32 %v837
    %vm844 = vmor %vm842, %vm843
    %v845 = vsel %vm844, %v837, %v841
    %v846 = vand.u32 2147483647, %v836
    %vm847 = vcmp.eq.f32.partialorder %v846, 8.507059e+37
    %v848 = vand.u32 %v836, 2147483648
    %v849 = vor.u32 1.1754944e-38, %v848
    %v850 = vsel %vm847, %v849, %v845
    %v851 = vmul.f32 %v834, %v850
    %852 = vrot.lane.b32.xlu0 %v728, 116
    %v853 = vpop.permute.xlu0 %852
    %v855 = vsel %vm730, %v853, 0.0
    %856 = vadd.xlane.f32.xlu0 %v855
    %v857 = vpop.xlane.xlu0 %856
    %v858 = vmul.f32 %v857, %v740
    %v859 = vsub.f32 %v728, %v858
    %v860 = vmul.f32 %v859, %v859
    %862 = vrot.lane.b32.xlu0 %v860, 116
    %v863 = vpop.permute.xlu0 %862
    %v865 = vsel %vm730, %v863, 0.0
    %866 = vadd.xlane.f32.xlu0 %v865
    %v867 = vpop.xlane.xlu0 %866
    %v868 = vmul.f32 %v867, %v753
    %v869 = vmul.f32 %v858, %v858
    %v870 = vadd.f32 %v869, 1e-10
    %v871 = vrcp.pop %v870
    %v872 = vmul.f32 %v870, %v871
    %v873 = vsub.f32 1.0, %v872
    %v874 = vmul.f32 %v871, %v873
    %v875 = vadd.f32 %v871, %v874
    %vm876 = vweird.f32 %v870
    %vm877 = vweird.f32 %v871
    %vm878 = vmor %vm876, %vm877
    %v879 = vsel %vm878, %v871, %v875
    %v880 = vand.u32 2147483647, %v870
    %vm881 = vcmp.eq.f32.partialorder %v880, 8.507059e+37
    %v882 = vand.u32 %v870, 2147483648
    %v883 = vor.u32 1.1754944e-38, %v882
    %v884 = vsel %vm881, %v883, %v879
    %v885 = vmul.f32 %v868, %v884
    %v886 = vadd.f32 %v851, %v885
    %v887 = vsel %vm808, %v886, 0.0
    %v888 = vrot.slane %v887, 4
    %v889 = vadd.f32 %v887, %v888
    %v890 = vrot.slane %v889, 2
    %v891 = vadd.f32 %v889, %v890
    %v892 = vrot.slane %v891, 1
    %v893 = vadd.f32 %v891, %v892
    %v894 = vmul.f32 %v893, 0.01
    %v895 = vadd.f32 %v817, %v894
    %vm896 = vcmask 0
    %897 = vst.msk [vmem:[#allocation2] sm:$0x1] %vm896, %v895
    // Predicated region
    $region50: #{tpu_custom_call.1} parent=1 // pred_check
      _
    $region51: #{tpu_custom_call.1} parent=1 // pred_check_branch
      %899 = sbr.rel (0) target = $region53
    $region52: #{tpu_custom_call.1} parent=1 // pred_region
      _
    $region53: #{tpu_custom_call.1} parent=1 // pred_fallthru
      _
    // Predicated region
    $region54: #{tpu_custom_call.1} parent=1 // pred_check
      _
    $region55: #{tpu_custom_call.1} parent=1 // pred_check_branch
      %901 = sbr.rel (0) target = $region57
    $region56: #{tpu_custom_call.1} parent=1 // pred_region
      %903 = vsyncadd [#allocation3], 0
      %s905 = sshll.u32 [#allocation2], 4
      %s906 = int_to_ptr.vmem [resolvable:$true] %s905
      %s907 = sshll.u32 %s13, 4
      %s908 = int_to_ptr.hbm [resolvable:$true] %s907
      %910 = dma.vmem_to_hbm [thread:$0]  %s906, 16, %s908, [#allocation3]
    $region57: #{tpu_custom_call.1} parent=1 // pred_fallthru
      _
    // Predicated region
    $region58: #{tpu_custom_call.1} parent=1 // pred_check
      _
    $region59: #{tpu_custom_call.1} parent=1 // pred_check_branch
      %912 = sbr.rel (0) target = $region61
    $region60: #{tpu_custom_call.1} parent=1 // pred_region
      _
    $region61: #{tpu_custom_call.1} parent=1 // pred_fallthru
      _
    // Predicated region
    $region62: #{tpu_custom_call.1} parent=1 // pred_check
      _
    $region63: #{tpu_custom_call.1} parent=1 // pred_check_branch
      %914 = sbr.rel (0) target = $region65
    $region64: #{tpu_custom_call.1} parent=1 // pred_region
      %916 = dma.done [#allocation3], 16
    $region65: #{tpu_custom_call.1} parent=1 // pred_fallthru
      _
    %917 = vsyncpa [#allocation3], 1

</llo_original>
